<compile_context>
chip_gen: v7x
topology: tpu7x:2x2x1
jax: 0.10.0
libtpu: 0.0.40
codegen_flags: <defaults>
</compile_context>

<pallas_src>
import functools

import jax
import jax.numpy as jnp
from jax.experimental import pallas as pl
from jax.experimental.pallas import tpu as pltpu


# ----------------------------------------------------------------------------- kernel
def _contact_loss_kernel(logits_ref, d_ref, *rest,
                         coeff, dist_min, bin_step, dist_max, num_bins,
                         num_pairs, tile_pairs, tiles_per_chunk, num_real_tiles,
                         ragged, has_mask, accumulate, approx_recip):
    # ref order: logits, d, [mask], then outputs: loss, [msum]
    if has_mask:
        mask_ref, rest = rest[0], rest[1:]
    else:
        mask_ref = None
    if accumulate and has_mask:
        loss_ref, msum_ref = rest
    else:
        (loss_ref,) = rest
        msum_ref = None

    if accumulate:
        c = pl.program_id(1)
        t = pl.program_id(2)
        g = c * tiles_per_chunk + t          # global pair-tile index
    else:
        t = pl.program_id(1)
        g = t

    if accumulate:
        @pl.when(t == 0)
        def _init():
            loss_ref[...] = jnp.zeros_like(loss_ref)
            if msum_ref is not None:
                msum_ref[...] = jnp.zeros_like(msum_ref)

    logits = logits_ref[0].astype(jnp.float32)            # (B, TP)  bins x pairs
    d = d_ref[0].astype(jnp.float32)                      # (1, TP)
    B, TP = logits.shape

    # ---- log-softmax statistics over the bin (sublane) axis ----
    m = jnp.max(logits, axis=0, keepdims=True)            # (1, TP)
    z = logits - m                                        # (B, TP)
    lse = jnp.log(jnp.sum(jnp.exp(z), axis=0, keepdims=True))   # (1, TP)
    # log_q = z - lse  (folded into the weighted bin sums below)

    # ---- DistanceToBins (use_onehot=False): Gaussian RBF bins + overflow bin ----
    # Evaluate the Gaussian on ALL B rows (including the fake last row), then
    # patch the overflow row with cheap (1, TP) corrections instead of two
    # full-tile (B, TP) selects.
    bin_idx = jax.lax.broadcasted_iota(jnp.int32, (B, 1), 0)        # (B, 1)
    offset = dist_min + bin_idx.astype(jnp.float32) * bin_step      # (B, 1)
    diff = d - offset                                               # (B, TP)
    log_g = coeff * diff * diff                                     # (B, TP) == log(rbf)
    gvals = jnp.exp(log_g)                                          # (B, TP)
    # TODO(synk): optional bf16 EUP exp (v6e/v7x) with f32 accumulation; kept
    #             f32 to stay safely within the 1e-4 rtol reference tolerance.

    # Weighted bin-axis sums (no p / kl_elem materialization):
    #   KL_pair = inv * (S1 - S2 + (lse - log_zden) * S0),  inv = 1/zden
    S0 = jnp.sum(gvals, axis=0, keepdims=True)                      # sum y
    S1 = jnp.sum(gvals * log_g, axis=0, keepdims=True)              # sum y*log y
    S2 = jnp.sum(gvals * z, axis=0, keepdims=True)                  # sum y*z
    S3 = jnp.sum(gvals * gvals, axis=0, keepdims=True)              # sum y^2

    # (1, TP) corrections: swap the fake Gaussian last row for the overflow bin
    # (value 1[d >= dist_max], log value 0; its y*log(y) term is exactly 0, which
    # also avoids 0*(-inf) NaNs entirely).
    glast = gvals[B - 1:B, :]
    llast = log_g[B - 1:B, :]
    zlast = z[B - 1:B, :]
    ovf = (d >= dist_max).astype(jnp.float32)                       # (1, TP)
    S0 = S0 - glast + ovf
    S1 = S1 - glast * llast
    S2 = S2 - glast * zlast + ovf * zlast
    S3 = S3 - glast * glast + ovf                                   # ovf^2 == ovf

    # normalize_vector (L2 norm over bins, eps=1e-6): per-pair transcendentals only
    zden = jnp.sqrt(S3) + 1e-6                                      # (1, TP)
    # approx=True moves the divide fully onto the EUP but is slightly less
    # precise; exposed as a knob, default exact for the per-pair map path.
    inv = pl.reciprocal(zden, approx=approx_recip)
    log_zden = jnp.log(zden)                                        # (1, TP)

    kl = inv * (S1 - S2 + (lse - log_zden) * S0)                    # (1, TP)

    mvec = mask_ref[0].astype(jnp.float32) if has_mask else None    # (1, TP)

    if accumulate:
        contrib = kl * mvec if has_mask else kl
        if ragged:
            # Only the last real tile (and any fully-empty overflow tiles that a
            # chunked grid adds) need lane masking; interior tiles skip it.
            @pl.when(g < num_real_tiles - 1)
            def _acc_interior():
                loss_ref[0] = loss_ref[0] + contrib
                if msum_ref is not None:
                    msum_ref[0] = msum_ref[0] + mvec

            @pl.when(g >= num_real_tiles - 1)
            def _acc_edge():
                lane = jax.lax.broadcasted_iota(jnp.int32, (1, TP), 1)
                valid = (g * tile_pairs + lane) < num_pairs
                loss_ref[0] = loss_ref[0] + jnp.where(valid, contrib, 0.0)
                if msum_ref is not None:
                    msum_ref[0] = msum_ref[0] + jnp.where(valid, mvec, 0.0)
        else:
            loss_ref[0] = loss_ref[0] + contrib
            if msum_ref is not None:
                msum_ref[0] = msum_ref[0] + mvec
    else:
        out_tile = kl * mvec if has_mask else kl
        if ragged:
            lane = jax.lax.broadcasted_iota(jnp.int32, (1, TP), 1)
            valid = (g * tile_pairs + lane) < num_pairs
            out_tile = jnp.where(valid, out_tile, 0.0)
        loss_ref[0] = out_tile


# ----------------------------------------------------------------------------- wrapper
def _round_up(x, m):
    return ((x + m - 1) // m) * m


def _device_kind():
    try:
        return jax.devices()[0].device_kind.lower()
    except Exception:
        return ""


def contact_loss(out, d_gt, mask_pair=None, reduction='mean',
                 dist_min=0.0, dist_max=20.0, num_bins=64,
                 tile_pairs=None, pair_chunks=None,
                 vmem_limit_bytes=None, approx_recip=False):
    """
    out:       (N, num_bins, L, L)  non-normalized histograms (bf16 or f32; keep
                                    bf16 in HBM if available - kernel upcasts)
    d_gt:      (N, 1, L, L)         ground-truth distances
    mask_pair: (N, L, L) or None    pairwise mask
    reduction: 'mean' | 'sum' | None (None returns the per-pair KL map (N, L, L))
    """
    N, B, L1, L2 = out.shape
    assert B == num_bins
    P = L1 * L2
    has_mask = mask_pair is not None
    accumulate = reduction is not None
    if accumulate and reduction not in ('mean', 'sum'):
        raise ValueError('Unknown reduction: %s' % reduction)

    kind = _device_kind()
    is_v7 = ('v7' in kind) or ('7x' in kind)
    is_v5 = ('v5' in kind)

    # NCHW read directly: bins on sublanes, pairs on lanes (free reshapes).
    logits = out.reshape(N, B, P)
    d = d_gt.reshape(N, 1, P)

    # Lane-aligned pair tile; large tiles amortize the ~0.35 us per-step overhead.
    if tile_pairs is None:
        tile_pairs = 4096 if is_v5 else 8192
    TP = min(int(tile_pairs), _round_up(P, 128))
    TP = max(128, (TP // 128) * 128)
    T = int(pl.cdiv(P, TP))

    # Optional leading parallel pair-chunk axis: feeds the 2nd TensorCore on v7x
    # when N is too small to shard over the batch axis.
    if accumulate:
        if pair_chunks is None:
            pair_chunks = 2 if (is_v7 and N < 2) else 1
        C = max(1, min(int(pair_chunks), T))
        Tc = int(pl.cdiv(T, C))
    else:
        C, Tc = 1, T

    ragged = (C * Tc * TP != P)

    if vmem_limit_bytes is None:
        # Re-derived per generation: v7x has 64 MiB physical VMEM, keep headroom.
        vmem_limit_bytes = (48 << 20) if is_v7 else (64 << 20)

    # DistanceToBins parameters (deterministic, from __init__)
    spacing = (dist_max - dist_min) / (num_bins - 2)
    coeff = -0.5 / ((spacing * 0.2) ** 2)

    kernel = functools.partial(
        _contact_loss_kernel,
        coeff=float(coeff), dist_min=float(dist_min), bin_step=float(spacing),
        dist_max=float(dist_max), num_bins=int(num_bins),
        num_pairs=int(P), tile_pairs=int(TP),
        tiles_per_chunk=int(Tc), num_real_tiles=int(T),
        ragged=bool(ragged), has_mask=has_mask, accumulate=accumulate,
        approx_recip=bool(approx_recip))

    inputs = [logits, d]
    if accumulate:
        if C * Tc > T:
            def _pblk(c, t):
                # clamp fully-empty overflow tiles back onto the last real tile
                return jnp.minimum(c * Tc + t, T - 1)
        else:
            def _pblk(c, t):
                return c * Tc + t
        in_specs = [
            pl.BlockSpec((1, num_bins, TP), lambda n, c, t: (n, 0, _pblk(c, t))),
            pl.BlockSpec((1, 1, TP), lambda n, c, t: (n, 0, _pblk(c, t))),
        ]
        if has_mask:
            in_specs.append(
                pl.BlockSpec((1, 1, TP), lambda n, c, t: (n, 0, _pblk(c, t))))
            inputs.append(mask_pair.reshape(N, 1, P))
        grid = (N, C, Tc)
        # lane-wide partial-sum accumulators, resident across the pair-tile axis
        out_shapes = [jax.ShapeDtypeStruct((N * C, 1, TP), jnp.float32)]
        out_specs = [pl.BlockSpec((1, 1, TP), lambda n, c, t: (n * C + c, 0, 0))]
        if has_mask:
            out_shapes.append(jax.ShapeDtypeStruct((N * C, 1, TP), jnp.float32))
            out_specs.append(
                pl.BlockSpec((1, 1, TP), lambda n, c, t: (n * C + c, 0, 0)))
        dims = ("parallel", "parallel", "arbitrary")
    else:
        in_specs = [
            pl.BlockSpec((1, num_bins, TP), lambda n, t: (n, 0, t)),
            pl.BlockSpec((1, 1, TP), lambda n, t: (n, 0, t)),
        ]
        if has_mask:
            in_specs.append(pl.BlockSpec((1, 1, TP), lambda n, t: (n, 0, t)))
            inputs.append(mask_pair.reshape(N, 1, P))
        grid = (N, T)
        # per-pair KL map output (last dim rounded up to full tiles; sliced below)
        out_shapes = [jax.ShapeDtypeStruct((N, 1, T * TP), jnp.float32)]
        out_specs = [pl.BlockSpec((1, 1, TP), lambda n, t: (n, 0, t))]
        dims = ("parallel", "parallel")

    in_bytes = sum(int(a.size) * int(a.dtype.itemsize) for a in inputs)
    out_bytes = sum(4 * s.shape[0] * s.shape[1] * s.shape[2] for s in out_shapes)
    cost = pl.CostEstimate(
        flops=int(20 * N * num_bins * P),
        transcendentals=int(2 * N * num_bins * P),
        bytes_accessed=int(in_bytes + out_bytes))

    results = pl.pallas_call(
        kernel,
        out_shape=tuple(out_shapes),
        grid_spec=pltpu.PrefetchScalarGridSpec(
            num_scalar_prefetch=0,
            grid=grid,
            in_specs=in_specs,
            out_specs=out_specs),
        compiler_params=pltpu.CompilerParams(
            dimension_semantics=dims,
            vmem_limit_bytes=int(vmem_limit_bytes)),
        cost_estimate=cost,
    )(*inputs)

    if not accumulate:
        # reduction=None: per-pair KL map (already masked), shape (N, L1, L2)
        return results[0][:, 0, :P].reshape(N, L1, L2)

    loss_sum = jnp.sum(results[0])
    if reduction == 'sum':
        return loss_sum
    # mean
    if has_mask:
        return loss_sum / jnp.sum(results[1])
    return loss_sum / jnp.float32(N * P)


# ----------------------------------------------------------------------------- reference
def contact_loss_ref(out, d_gt, mask_pair=None, reduction='mean',
                     dist_min=0.0, dist_max=20.0, num_bins=64):
    N, B, L1, L2 = out.shape
    offs = jnp.linspace(dist_min, dist_max, num_bins - 1,
                        dtype=jnp.float32).reshape(1, -1, 1, 1)
    spacing = (dist_max - dist_min) / (num_bins - 2)
    coeff = -0.5 / ((spacing * 0.2) ** 2)
    d = d_gt.astype(jnp.float32)
    overflow = (d >= dist_max).astype(jnp.float32)
    y = jnp.exp(coeff * (d - offs) ** 2)
    y = jnp.concatenate([y, overflow], axis=1)
    nrm = jnp.sqrt(jnp.sum(y * y, axis=1, keepdims=True))
    p = y / (nrm + 1e-6)
    log_q = jax.nn.log_softmax(out.astype(jnp.float32), axis=1)
    kl = jnp.where(p > 0.0, p * jnp.log(p), 0.0) - p * log_q
    if mask_pair is not None:
        kl = kl * mask_pair[:, None, :, :]
        n = mask_pair.sum()
    else:
        n = N * L1 * L2
    if reduction == 'mean':
        return kl.sum() / n
    elif reduction == 'sum':
        return kl.sum()
    elif reduction is None:
        return kl.sum(axis=1)
    raise ValueError('Unknown reduction: %s' % reduction)


# ----------------------------------------------------------------------------- main
if __name__ == "__main__":
    key = jax.random.PRNGKey(0)
    k1, k2, k3, k4, k5, k6 = jax.random.split(key, 6)

    N, num_bins, L = 2, 64, 16
    out = jax.random.normal(k1, (N, num_bins, L, L), dtype=jnp.float32)
    d_gt = jax.random.uniform(k2, (N, 1, L, L), minval=0.0, maxval=25.0,
                              dtype=jnp.float32)
    mask_pair = (jax.random.uniform(k3, (N, L, L)) > 0.3).astype(jnp.float32)

    # no-mask, mean reduction
    loss_a = jax.block_until_ready(contact_loss(out, d_gt, None, 'mean'))
    ref_a = contact_loss_ref(out, d_gt, None, 'mean')
    assert jnp.allclose(loss_a, ref_a, rtol=1e-4, atol=1e-5), (loss_a, ref_a)

    # masked, mean reduction
    loss_b = jax.block_until_ready(contact_loss(out, d_gt, mask_pair, 'mean'))
    ref_b = contact_loss_ref(out, d_gt, mask_pair, 'mean')
    assert jnp.allclose(loss_b, ref_b, rtol=1e-4, atol=1e-5), (loss_b, ref_b)

    # masked, sum reduction
    loss_c = jax.block_until_ready(contact_loss(out, d_gt, mask_pair, 'sum'))
    ref_c = contact_loss_ref(out, d_gt, mask_pair, 'sum')
    assert jnp.allclose(loss_c, ref_c, rtol=1e-4, atol=1e-3), (loss_c, ref_c)

    # reduction=None: per-pair KL map
    map_d = jax.block_until_ready(contact_loss(out, d_gt, mask_pair, None))
    ref_d = contact_loss_ref(out, d_gt, mask_pair, None)
    assert map_d.shape == (N, L, L)
    assert jnp.allclose(map_d, ref_d, rtol=1e-4, atol=1e-4)

    # odd spatial size -> multi-tile grid with a ragged last pair tile
    Lr = 18
    out_r = jax.random.normal(k4, (N, num_bins, Lr, Lr), dtype=jnp.float32)
    d_r = jax.random.uniform(k5, (N, 1, Lr, Lr), minval=0.0, maxval=25.0,
                             dtype=jnp.float32)
    mask_r = (jax.random.uniform(k6, (N, Lr, Lr)) > 0.3).astype(jnp.float32)
    ref_e = contact_loss_ref(out_r, d_r, mask_r, 'mean')
    loss_e = jax.block_until_ready(
        contact_loss(out_r, d_r, mask_r, 'mean', tile_pairs=128, pair_chunks=1))
    assert jnp.allclose(loss_e, ref_e, rtol=1e-4, atol=1e-5), (loss_e, ref_e)

    # ragged + chunked pair axis (the v7x two-TensorCore grid shape, including
    # a fully-empty overflow tile handled by the clamped index_map)
    loss_f = jax.block_until_ready(
        contact_loss(out_r, d_r, mask_r, 'mean', tile_pairs=128, pair_chunks=2))
    assert jnp.allclose(loss_f, ref_e, rtol=1e-4, atol=1e-5), (loss_f, ref_e)

    # ragged reduction=None per-pair map
    map_g = jax.block_until_ready(
        contact_loss(out_r, d_r, mask_r, None, tile_pairs=128))
    ref_g = contact_loss_ref(out_r, d_r, mask_r, None)
    assert map_g.shape == (N, Lr, Lr)
    assert jnp.allclose(map_g, ref_g, rtol=1e-4, atol=1e-4)

    # bf16 logits stay bf16 in HBM (v5e roofline lever); kernel upcasts in VMEM
    out_bf16 = out.astype(jnp.bfloat16)
    loss_h = jax.block_until_ready(contact_loss(out_bf16, d_gt, mask_pair, 'mean'))
    ref_h = contact_loss_ref(out_bf16, d_gt, mask_pair, 'mean')
    assert jnp.allclose(loss_h, ref_h, rtol=1e-4, atol=1e-5), (loss_h, ref_h)

    print("KERNEL_OK")
</pallas_src>

<mosaic_0001>
module attributes {stable_mosaic.version = 11 : i64} {
  func.func @_contact_loss_kernel(%arg0: i32, %arg1: i32, %arg2: i32, %arg3: memref<1x64x256xf32, #tpu.memory_space<vmem>>, %arg4: memref<1x1x256xf32, #tpu.memory_space<vmem>>, %arg5: memref<1x1x256xf32, #tpu.memory_space<vmem>>) attributes {dimension_semantics = [#tpu.dimension_semantics<parallel>, #tpu.dimension_semantics<parallel>, #tpu.dimension_semantics<arbitrary>], iteration_bounds = array<i64: 2, 1, 1>, scalar_prefetch = 0 : i64, scratch_operands = 0 : i64, tpu.core_type = #tpu.core_type<tc>, window_params = [{transform_indices = @transform_0, window_bounds = array<i64: 1, 64, 256>}, {transform_indices = @transform_1, window_bounds = array<i64: 1, 1, 256>}, {transform_indices = @transform_2, window_bounds = array<i64: 1, 1, 256>}]} {
    %c0_i32 = arith.constant 0 : i32
    %0 = arith.cmpi eq, %arg2, %c0_i32 : i32
    %1 = arith.extui %0 : i1 to i32
    %c0_i32_0 = arith.constant 0 : i32
    %2 = arith.cmpi ne, %1, %c0_i32_0 : i32
    scf.if %2 {
      %cst_22 = arith.constant 0.000000e+00 : f32
      %73 = vector.broadcast %cst_22 : f32 to vector<1x1x256xf32>
      %c0_23 = arith.constant 0 : index
      %c0_24 = arith.constant 0 : index
      %c0_25 = arith.constant 0 : index
      %74 = vector.load %arg5[%c0_23, %c0_24, %c0_25] : memref<1x1x256xf32, #tpu.memory_space<vmem>>, vector<1x1x256xf32>
      tpu.vector_store %arg5[%c0_23, %c0_24, %c0_25], %73 {strides = array<i32>} : memref<1x1x256xf32, #tpu.memory_space<vmem>>, vector<1x1x256xf32>,
    } else {
    }
    %c0 = arith.constant 0 : index
    %c0_1 = arith.constant 0 : index
    %c0_2 = arith.constant 0 : index
    %3 = vector.load %arg3[%c0, %c0_1, %c0_2] : memref<1x64x256xf32, #tpu.memory_space<vmem>>, vector<1x64x256xf32>
    %4 = vector.shape_cast %3 : vector<1x64x256xf32> to vector<64x256xf32>
    %c0_3 = arith.constant 0 : index
    %c0_4 = arith.constant 0 : index
    %c0_5 = arith.constant 0 : index
    %5 = vector.load %arg4[%c0_3, %c0_4, %c0_5] : memref<1x1x256xf32, #tpu.memory_space<vmem>>, vector<1x1x256xf32>
    %6 = vector.shape_cast %5 : vector<1x1x256xf32> to vector<1x256xf32>
    %cst = arith.constant dense<0xFF800000> : vector<256xf32>
    %7 = vector.multi_reduction <maximumf>, %4, %cst [0] : vector<64x256xf32> to vector<256xf32>
    %8 = vector.shape_cast %7 : vector<256xf32> to vector<1x256xf32>
    %9 = vector.broadcast %8 : vector<1x256xf32> to vector<64x256xf32>
    %10 = arith.subf %4, %9 : vector<64x256xf32>
    %11 = math.exp %10 : vector<64x256xf32>
    %cst_6 = arith.constant dense<0.000000e+00> : vector<256xf32>
    %12 = vector.multi_reduction <add>, %11, %cst_6 [0] : vector<64x256xf32> to vector<256xf32>
    %13 = vector.shape_cast %12 : vector<256xf32> to vector<1x256xf32>
    %14 = math.log %13 : vector<1x256xf32>
    %15 = tpu.iota {dimensions = array<i32: 0>} : vector<64x1xi32>
    %16 = arith.sitofp %15 : vector<64x1xi32> to vector<64x1xf32>
    %cst_7 = arith.constant 0.322580636 : f32
    %17 = vector.broadcast %cst_7 : f32 to vector<64x1xf32>
    %18 = arith.mulf %16, %17 : vector<64x1xf32>
    %cst_8 = arith.constant 0.000000e+00 : f32
    %19 = vector.broadcast %cst_8 : f32 to vector<64x1xf32>
    %20 = arith.addf %19, %18 : vector<64x1xf32>
    %21 = vector.broadcast %6 : vector<1x256xf32> to vector<64x256xf32>
    %22 = vector.broadcast %20 : vector<64x1xf32> to vector<64x256xf32>
    %23 = arith.subf %21, %22 : vector<64x256xf32>
    %cst_9 = arith.constant -1.201250e+02 : f32
    %24 = vector.broadcast %cst_9 : f32 to vector<64x256xf32>
    %25 = arith.mulf %24, %23 : vector<64x256xf32>
    %26 = arith.mulf %25, %23 : vector<64x256xf32>
    %27 = math.exp %26 : vector<64x256xf32>
    %cst_10 = arith.constant dense<0.000000e+00> : vector<256xf32>
    %28 = vector.multi_reduction <add>, %27, %cst_10 [0] : vector<64x256xf32> to vector<256xf32>
    %29 = vector.shape_cast %28 : vector<256xf32> to vector<1x256xf32>
    %30 = arith.mulf %27, %26 : vector<64x256xf32>
    %cst_11 = arith.constant dense<0.000000e+00> : vector<256xf32>
    %31 = vector.multi_reduction <add>, %30, %cst_11 [0] : vector<64x256xf32> to vector<256xf32>
    %32 = vector.shape_cast %31 : vector<256xf32> to vector<1x256xf32>
    %33 = arith.mulf %27, %10 : vector<64x256xf32>
    %cst_12 = arith.constant dense<0.000000e+00> : vector<256xf32>
    %34 = vector.multi_reduction <add>, %33, %cst_12 [0] : vector<64x256xf32> to vector<256xf32>
    %35 = vector.shape_cast %34 : vector<256xf32> to vector<1x256xf32>
    %36 = arith.mulf %27, %27 : vector<64x256xf32>
    %cst_13 = arith.constant dense<0.000000e+00> : vector<256xf32>
    %37 = vector.multi_reduction <add>, %36, %cst_13 [0] : vector<64x256xf32> to vector<256xf32>
    %38 = vector.shape_cast %37 : vector<256xf32> to vector<1x256xf32>
    %39 = vector.extract_strided_slice %27 {offsets = [63, 0], sizes = [1, 256], strides = [1, 1]} : vector<64x256xf32> to vector<1x256xf32>
    %40 = vector.extract_strided_slice %26 {offsets = [63, 0], sizes = [1, 256], strides = [1, 1]} : vector<64x256xf32> to vector<1x256xf32>
    %41 = vector.extract_strided_slice %10 {offsets = [63, 0], sizes = [1, 256], strides = [1, 1]} : vector<64x256xf32> to vector<1x256xf32>
    %cst_14 = arith.constant 2.000000e+01 : f32
    %42 = vector.broadcast %cst_14 : f32 to vector<1x256xf32>
    %43 = arith.cmpf oge, %6, %42 : vector<1x256xf32>
    %44 = arith.extui %43 : vector<1x256xi1> to vector<1x256xi32>
    %45 = arith.sitofp %44 : vector<1x256xi32> to vector<1x256xf32>
    %46 = arith.subf %29, %39 : vector<1x256xf32>
    %47 = arith.addf %46, %45 : vector<1x256xf32>
    %48 = arith.mulf %39, %40 : vector<1x256xf32>
    %49 = arith.subf %32, %48 : vector<1x256xf32>
    %50 = arith.mulf %39, %41 : vector<1x256xf32>
    %51 = arith.subf %35, %50 : vector<1x256xf32>
    %52 = arith.mulf %45, %41 : vector<1x256xf32>
    %53 = arith.addf %51, %52 : vector<1x256xf32>
    %54 = arith.mulf %39, %39 : vector<1x256xf32>
    %55 = arith.subf %38, %54 : vector<1x256xf32>
    %56 = arith.addf %55, %45 : vector<1x256xf32>
    %57 = math.sqrt %56 : vector<1x256xf32>
    %cst_15 = arith.constant 9.99999997E-7 : f32
    %58 = vector.broadcast %cst_15 : f32 to vector<1x256xf32>
    %59 = arith.addf %57, %58 : vector<1x256xf32>
    %60 = tpu.reciprocal %59 : vector<1x256xf32> -> vector<1x256xf32>
    %61 = math.log %59 : vector<1x256xf32>
    %62 = arith.subf %49, %53 : vector<1x256xf32>
    %63 = arith.subf %14, %61 : vector<1x256xf32>
    %64 = arith.mulf %63, %47 : vector<1x256xf32>
    %65 = arith.addf %62, %64 : vector<1x256xf32>
    %66 = arith.mulf %60, %65 : vector<1x256xf32>
    %c0_16 = arith.constant 0 : index
    %c0_17 = arith.constant 0 : index
    %c0_18 = arith.constant 0 : index
    %67 = vector.load %arg5[%c0_16, %c0_17, %c0_18] : memref<1x1x256xf32, #tpu.memory_space<vmem>>, vector<1x1x256xf32>
    %68 = vector.shape_cast %67 : vector<1x1x256xf32> to vector<1x256xf32>
    %69 = arith.addf %68, %66 : vector<1x256xf32>
    %c0_19 = arith.constant 0 : index
    %c0_20 = arith.constant 0 : index
    %c0_21 = arith.constant 0 : index
    %70 = vector.load %arg5[%c0_19, %c0_20, %c0_21] : memref<1x1x256xf32, #tpu.memory_space<vmem>>, vector<1x1x256xf32>
    %71 = vector.shape_cast %70 : vector<1x1x256xf32> to vector<1x256xf32>
    %72 = vector.shape_cast %69 : vector<1x256xf32> to vector<1x1x256xf32>
    tpu.vector_store %arg5[%c0_19, %c0_20, %c0_21], %72 {strides = array<i32>} : memref<1x1x256xf32, #tpu.memory_space<vmem>>, vector<1x1x256xf32>,
    return
  }
  func.func @transform_0(%arg0: i32, %arg1: i32, %arg2: i32) -> (i32, i32, i32) {
    %c1_i32 = arith.constant 1 : i32
    %0 = arith.muli %arg1, %c1_i32 : i32
    %1 = arith.addi %0, %arg2 : i32
    %c0_i32 = arith.constant 0 : i32
    %c0_i32_0 = arith.constant 0 : i32
    return %arg0, %c0_i32, %1 : i32, i32, i32
  }
  func.func @transform_1(%arg0: i32, %arg1: i32, %arg2: i32) -> (i32, i32, i32) {
    %c1_i32 = arith.constant 1 : i32
    %0 = arith.muli %arg1, %c1_i32 : i32
    %1 = arith.addi %0, %arg2 : i32
    %c0_i32 = arith.constant 0 : i32
    %c0_i32_0 = arith.constant 0 : i32
    return %arg0, %c0_i32, %1 : i32, i32, i32
  }
  func.func @transform_2(%arg0: i32, %arg1: i32, %arg2: i32) -> (i32, i32, i32) {
    %c1_i32 = arith.constant 1 : i32
    %0 = arith.muli %arg0, %c1_i32 : i32
    %1 = arith.addi %0, %arg1 : i32
    %c0_i32 = arith.constant 0 : i32
    %c0_i32_0 = arith.constant 0 : i32
    %c0_i32_1 = arith.constant 0 : i32
    return %1, %c0_i32, %c0_i32_0 : i32, i32, i32
  }
}

</mosaic_0001>

<llo_original>
// kernel: tpu_custom_call.1
$region0: #{tpu_custom_call.1}
  #allocation0 [shape = 'u32[]', space=smem, size = 0x4, offset = 0x4, fixed_abs, tag = 'smem constant byte address 0x4 - core index']
  #allocation1 [shape = 'u32[144,128]{1,0:T(1,128)}', space=vmem, size = 0x12000, scoped, tag = 'internal scratch']
  %s0 = inlined_call_operand.hbm [shape: f32[2,64,256], index: 0, kind: input, shape index: {}]
  %s1 = inlined_call_operand.hbm [shape: f32[2,1,256], index: 1, kind: input, shape index: {}]
  %s2 = inlined_call_operand.hbm [shape: f32[2,1,256], index: 2, kind: output, shape index: {}]
  %s3 = sld [smem:[#allocation0]]
  $region53: #{tpu_custom_call.1} parent=0
    _
  %s5 = ssub.s32 1, %s3
  %s6 = scalar_select 0, %s5, %s3
  $region1: #{tpu_custom_call.1} parent=0
    #allocation2 [shape = 'u8[131072]{0}', space=vmem, size = 0x20000, scoped, tag = 'input window, operand 0']
    #allocation3 [shape = 's32[2]{0}', space=sflag, size = 0x8, scoped, tag = 'scoped memory for tpu_custom_call.1']
    #allocation4 [shape = 's32[2]{0}', space=sflag, size = 0x8, scoped, tag = 'scoped memory for tpu_custom_call.1']
    #allocation5 [shape = 'u8[2048]{0}', space=vmem, size = 0x800, scoped, tag = 'input window, operand 1']
    #allocation6 [shape = 's32[2]{0}', space=sflag, size = 0x8, scoped, tag = 'scoped memory for tpu_custom_call.1']
    #allocation7 [shape = 'u8[2048]{0}', space=vmem, size = 0x800, scoped, tag = 'output window, operand 0']
    %7 = vsyncpa [#allocation3], 0
    %s8 = scalar_lea.sflag [#allocation3], 1
    %9 = vsyncpa %s8, 0
    %10 = vsyncpa [#allocation6], 0
    %s11 = scalar_lea.sflag [#allocation6], 1
    %12 = vsyncpa %s11, 0
    %13 = vsyncpa [#allocation4], 0
    %s14 = scalar_lea.sflag [#allocation4], 1
    %15 = vsyncpa %s14, 0
    loop: start=0, step=1, limit=4
    $region2: #{tpu_custom_call.1} parent=1 // loop_pre_header
      _
    $region3: #{tpu_custom_call.1} parent=1 // loop_header
      %s17 = sphi 0, %s21
      %p18 = scmp.ge.s32.totalorder %s17, 4
      %s24 = sphi 0, %s43
      %s25 = sphi 0, %s39
      %s26 = sphi 0, %s35
      %s27 = sphi 0, %s24
      %s28 = sphi 0, %s25
      %s29 = sphi 0, %s26
      %s30 = sphi 0, %s27
      %s31 = sphi 0, %s28
      %s32 = sphi 0, %s29
      %s50 = sphi 0, %s52
      %s53 = sphi 0, %s50
      %s54 = sphi 0, %s53
      %s70 = sphi 0, %s54
      %s80 = sphi 0, %s82
      %s83 = sphi 0, %s80
      %s84 = sphi 0, %s83
      %s100 = sphi 0, %s84
      %s108 = sphi 0, %s110
      %s111 = sphi 0, %s108
      %s112 = sphi 0, %s111
      %s128 = sphi 0, %s112
    $region4: #{tpu_custom_call.1} parent=1 // loop_header_branch
      %20 = sbr.rel (%p18) target = $region8
    $region5: #{tpu_custom_call.1} parent=1 // loop_body
      %s22 = ssub.s32 %s17, 1
      %s23 = ssub.s32 %s17, 2
      %s33 = sadd.s32 1, %s26
      %p34 = scmp.ge.s32.totalorder %s33, 1
      %s35 = scalar_select %p34, 0, %s33
      %s36 = sadd.s32 1, %s25
      %s37 = scalar_select %p34, %s36, %s25
      %p38 = scmp.ge.s32.totalorder %s37, 1
      %s39 = scalar_select %p38, 0, %s37
      %s40 = sadd.s32 1, %s24
      %s41 = scalar_select %p38, %s40, %s24
      %p42 = scmp.ge.s32.totalorder %s41, 2
      %s43 = scalar_select %p42, 0, %s41
      %s44 = sadd.s32 %s25, %s26
      %s45 = sadd.s32 %s39, %s35
      %s46 = ssub.s32 %s24, %s43
      %s47 = ssub.s32 %s44, %s45
      %s48 = sor.u32 %s46, %s47
      %p49 = scmp.eq.s32.totalorder %s48, 0
      %s51 = sadd.s32 %s50, 1
      %s52 = scalar_select %p49, %s50, %s51
      %p55 = pneg %p49
      %p56 = scmp.eq.s32.totalorder %s17, 1
      %p57 = por %p55, %p56
      %p58 = scmp.ne.s32.totalorder %s50, %s53
      %p59 = scmp.eq.s32.totalorder %s17, 0
      %p60 = por %p58, %p59
      %p61 = scmp.ne.s32.totalorder %s50, %s53
      %p62 = scmp.eq.s32.totalorder %s22, 1
      %p63 = por %p61, %p62
      %p64 = scmp.ne.s32.totalorder %s53, %s54
      %p65 = scmp.eq.s32.totalorder %s22, 0
      %p66 = por %p64, %p65
      %p67 = scmp.ne.s32.totalorder %s53, %s54
      %p68 = scmp.eq.s32.totalorder %s23, 1
      %p69 = por %p67, %p68
      %p71 = scmp.ne.s32.totalorder %s54, %s70
      %p72 = scmp.eq.s32.totalorder %s23, 0
      %p73 = por %p71, %p72
      %s74 = sadd.s32 %s25, %s26
      %s75 = sadd.s32 %s39, %s35
      %s76 = ssub.s32 %s24, %s43
      %s77 = ssub.s32 %s74, %s75
      %s78 = sor.u32 %s76, %s77
      %p79 = scmp.eq.s32.totalorder %s78, 0
      %s81 = sadd.s32 %s80, 1
      %s82 = scalar_select %p79, %s80, %s81
      %p85 = pneg %p79
      %p86 = scmp.eq.s32.totalorder %s17, 1
      %p87 = por %p85, %p86
      %p88 = scmp.ne.s32.totalorder %s80, %s83
      %p89 = scmp.eq.s32.totalorder %s17, 0
      %p90 = por %p88, %p89
      %p91 = scmp.ne.s32.totalorder %s80, %s83
      %p92 = scmp.eq.s32.totalorder %s22, 1
      %p93 = por %p91, %p92
      %p94 = scmp.ne.s32.totalorder %s83, %s84
      %p95 = scmp.eq.s32.totalorder %s22, 0
      %p96 = por %p94, %p95
      %p97 = scmp.ne.s32.totalorder %s83, %s84
      %p98 = scmp.eq.s32.totalorder %s23, 1
      %p99 = por %p97, %p98
      %p101 = scmp.ne.s32.totalorder %s84, %s100
      %p102 = scmp.eq.s32.totalorder %s23, 0
      %p103 = por %p101, %p102
      %s104 = sadd.s32 %s24, %s25
      %s105 = sadd.s32 %s43, %s39
      %s106 = ssub.s32 %s104, %s105
      %p107 = scmp.eq.s32.totalorder %s106, 0
      %s109 = sadd.s32 %s108, 1
      %s110 = scalar_select %p107, %s108, %s109
      %p113 = pneg %p107
      %p114 = scmp.eq.s32.totalorder %s17, 1
      %p115 = por %p113, %p114
      %p116 = scmp.ne.s32.totalorder %s108, %s111
      %p117 = scmp.eq.s32.totalorder %s17, 0
      %p118 = por %p116, %p117
      %p119 = scmp.ne.s32.totalorder %s108, %s111
      %p120 = scmp.eq.s32.totalorder %s22, 1
      %p121 = por %p119, %p120
      %p122 = scmp.ne.s32.totalorder %s111, %s112
      %p123 = scmp.eq.s32.totalorder %s22, 0
      %p124 = por %p122, %p123
      %p125 = scmp.ne.s32.totalorder %s111, %s112
      %p126 = scmp.eq.s32.totalorder %s23, 1
      %p127 = por %p125, %p126
      %p129 = scmp.ne.s32.totalorder %s112, %s128
      %p130 = scmp.eq.s32.totalorder %s23, 0
      %p131 = por %p129, %p130
      %p132 = scmp.le.s32.totalorder 1, %s17
      %p133 = scmp.lt.s32.totalorder %s17, 3
      %p134 = pnand %p132, %p133
      %p135 = pneg %p134
      // Predicated region
      $region9: #{tpu_custom_call.1} parent=5 // pred_check
        _
      $region10: #{tpu_custom_call.1} parent=5 // pred_check_branch
        %137 = sbr.rel (%p134) target = $region12
      $region11: #{tpu_custom_call.1} parent=5 // pred_region
        %s138 = ssub.s32 %s17, 1
      $region12: #{tpu_custom_call.1} parent=5 // pred_fallthru
        _
      %p139 = scmp.lt.s32.totalorder %s17, 2
      // Predicated region
      $region13: #{tpu_custom_call.1} parent=5 // pred_check
        %p140 = pneg %p139
      $region14: #{tpu_custom_call.1} parent=5 // pred_check_branch
        %142 = sbr.rel (%p140) target = $region16
      $region15: #{tpu_custom_call.1} parent=5 // pred_region
        // Predicated region
        $region17: #{tpu_custom_call.1} parent=15 // pred_check
          %p143 = pneg %p60
        $region18: #{tpu_custom_call.1} parent=15 // pred_check_branch
          %145 = sbr.rel (%p143) target = $region20
        $region19: #{tpu_custom_call.1} parent=15 // pred_region
          %s146 = sand.u32 %s50, 1
          %s147 = scalar_lea.sflag [#allocation3], %s146
          %s148 = sand.u32 %s50, 1
          %s149 = smul.addr %s148, 128
          %s150 = scalar_lea.vmem [#allocation2], %s149
          %s151 = sadd.s32 %s25, %s26
          %s152 = smul.u32 2, %s151
          %s154 = ssub.s32 2048, 2048
          %155 = vsyncadd %s147, %s154
          %s156 = smul.addr %s24, 16
          %s157 = sadd.s32 %s152, %s156
          %s158 = smul.addr %s157, 128
          %s159 = scalar_lea.hbm %s0, %s158
          %s160 = sshll.u32 %s150, 4
          %s161 = int_to_ptr.vmem [resolvable:$true] %s160
          %166 = dma.hbm_to_vmem [thread:$0]  %s159, 2048, %s161, %s147, 256, 256, 16
        $region20: #{tpu_custom_call.1} parent=15 // pred_fallthru
          _
        // Predicated region
        $region21: #{tpu_custom_call.1} parent=15 // pred_check
          %p167 = pneg %p90
        $region22: #{tpu_custom_call.1} parent=15 // pred_check_branch
          %169 = sbr.rel (%p167) target = $region24
        $region23: #{tpu_custom_call.1} parent=15 // pred_region
          %s170 = sand.u32 %s80, 1
          %s171 = scalar_lea.sflag [#allocation6], %s170
          %s172 = sand.u32 %s80, 1
          %s173 = smul.addr %s172, 2
          %s174 = scalar_lea.vmem [#allocation5], %s173
          %s175 = sadd.s32 %s25, %s26
          %s176 = smul.u32 2, %s175
          %s178 = ssub.s32 32, 32
          %179 = vsyncadd %s171, %s178
          %s180 = smul.addr %s24, 2
          %s181 = sadd.s32 %s176, %s180
          %s182 = smul.addr %s181, 16
          %s183 = scalar_lea.hbm %s1, %s182
          %s185 = sshll.u32 %s174, 4
          %s186 = int_to_ptr.vmem [resolvable:$true] %s185
          %188 = dma.hbm_to_vmem [thread:$0]  %s183, 32, %s186, %s171
        $region24: #{tpu_custom_call.1} parent=15 // pred_fallthru
          _
      $region16: #{tpu_custom_call.1} parent=5 // pred_fallthru
        _
      %p189 = scmp.le.s32.totalorder 1, %s17
      %p190 = scmp.lt.s32.totalorder %s17, 3
      %p191 = pnand %p189, %p190
      %p192 = pneg %p191
      // Predicated region
      $region25: #{tpu_custom_call.1} parent=5 // pred_check
        _
      $region26: #{tpu_custom_call.1} parent=5 // pred_check_branch
        %194 = sbr.rel (%p191) target = $region28
      $region27: #{tpu_custom_call.1} parent=5 // pred_region
        %s195 = ssub.s32 %s17, 1
        %s196 = sand.u32 %s53, 1
        %s197 = scalar_lea.sflag [#allocation3], %s196
        %s198 = sand.u32 %s53, 1
        %s199 = smul.addr %s198, 128
        %s200 = scalar_lea.vmem [#allocation2], %s199
        // Predicated region
        $region29: #{tpu_custom_call.1} parent=27 // pred_check
          %p201 = pneg %p66
        $region30: #{tpu_custom_call.1} parent=27 // pred_check_branch
          %203 = sbr.rel (%p201) target = $region32
        $region31: #{tpu_custom_call.1} parent=27 // pred_region
          %204 = dma.done %s197, 2048
        $region32: #{tpu_custom_call.1} parent=27 // pred_fallthru
          _
        %s205 = sand.u32 %s83, 1
        %s206 = scalar_lea.sflag [#allocation6], %s205
        %s207 = sand.u32 %s83, 1
        %s208 = smul.addr %s207, 2
        %s209 = scalar_lea.vmem [#allocation5], %s208
        // Predicated region
        $region33: #{tpu_custom_call.1} parent=27 // pred_check
          %p210 = pneg %p96
        $region34: #{tpu_custom_call.1} parent=27 // pred_check_branch
          %212 = sbr.rel (%p210) target = $region36
        $region35: #{tpu_custom_call.1} parent=27 // pred_region
          %213 = dma.done %s206, 32
        $region36: #{tpu_custom_call.1} parent=27 // pred_fallthru
          _
        %s214 = sand.u32 %s53, 1
        %s215 = scalar_lea.sflag [#allocation3], %s214
        %s216 = sand.u32 %s53, 1
        %s217 = smul.addr %s216, 128
        %s218 = scalar_lea.vmem [#allocation2], %s217
        %p219 = pneg %p66
        %p220 = pneg %p63
        %s221 = sand.u32 %s83, 1
        %s222 = scalar_lea.sflag [#allocation6], %s221
        %s223 = sand.u32 %s83, 1
        %s224 = smul.addr %s223, 2
        %s225 = scalar_lea.vmem [#allocation5], %s224
        %p226 = pneg %p96
        %p227 = pneg %p93
        %p228 = pneg %p124
        %p229 = pneg %p121
        %s230 = sand.u32 %s111, 1
        %s231 = scalar_lea.sflag [#allocation4], %s230
        %s232 = sand.u32 %s111, 1
        %s233 = smul.addr %s232, 2
        %s234 = scalar_lea.vmem [#allocation7], %s233
        %s235 = sadd.s32 %s28, %s29
        %s236 = smul.u32 2, %s235
        %s237 = sadd.s32 %s28, %s29
        %s238 = smul.u32 2, %s237
        %s239 = sadd.s32 %s27, %s28
        %p240 = scmp.eq.s32.totalorder %s29, 0
        // Predicated region
        $region37: #{tpu_custom_call.1} parent=27 // pred_check
          %p241 = pneg %p240
        $region38: #{tpu_custom_call.1} parent=27 // pred_check_branch
          %243 = sbr.rel (%p241) target = $region40
        $region39: #{tpu_custom_call.1} parent=27 // pred_region
          %v244 = vlaneseq
          %vm245 = vcmp.ge.s32.totalorder %v244, 0
          %vm246 = vcmp.lt.s32.totalorder %v244, 256
          %vm247 = vmand %vm245, %vm246
          %248 = vst.msk [vmem:[%s234] sm:$0x3] %vm247, 0.0
        $region40: #{tpu_custom_call.1} parent=27 // pred_fallthru
          _
        %v249 = vld [vmem:[%s200] sm:$0xff]
        %v250 = vld [vmem:[%s200 + $0x8] sm:$0xff]
        %v251 = vld [vmem:[%s200 + $0x10] sm:$0xff]
        %v252 = vld [vmem:[%s200 + $0x18] sm:$0xff]
        %v253 = vld [vmem:[%s200 + $0x20] sm:$0xff]
        %v254 = vld [vmem:[%s200 + $0x28] sm:$0xff]
        %v255 = vld [vmem:[%s200 + $0x30] sm:$0xff]
        %v256 = vld [vmem:[%s200 + $0x38] sm:$0xff]
        %v257 = vld [vmem:[%s200 + $0x40] sm:$0xff]
        %v258 = vld [vmem:[%s200 + $0x48] sm:$0xff]
        %v259 = vld [vmem:[%s200 + $0x50] sm:$0xff]
        %v260 = vld [vmem:[%s200 + $0x58] sm:$0xff]
        %v261 = vld [vmem:[%s200 + $0x60] sm:$0xff]
        %v262 = vld [vmem:[%s200 + $0x68] sm:$0xff]
        %v263 = vld [vmem:[%s200 + $0x70] sm:$0xff]
        %v264 = vld [vmem:[%s200 + $0x78] sm:$0xff]
        %v265 = vld [vmem:[%s209] sm:$0x3]
        %v266 = vmax.f32 %v249, %v253
        %v267 = vmax.f32 %v251, %v255
        %v268 = vmax.f32 %v266, %v257
        %v269 = vmax.f32 %v267, %v259
        %v270 = vmax.f32 %v268, %v261
        %v271 = vmax.f32 %v269, %v263
        %v272 = vmax.f32 %v270, %v271
        %v273 = vrot.slane %v272, 4
        %v274 = vmax.f32 %v272, %v273
        %v275 = vrot.slane %v274, 2
        %v276 = vmax.f32 %v274, %v275
        %v277 = vrot.slane %v276, 1
        %v278 = vmax.f32 %v276, %v277
        %v279 = vmax.f32 %v250, %v254
        %v280 = vmax.f32 %v252, %v256
        %v281 = vmax.f32 %v279, %v258
        %v282 = vmax.f32 %v280, %v260
        %v283 = vmax.f32 %v281, %v262
        %v284 = vmax.f32 %v282, %v264
        %v285 = vmax.f32 %v283, %v284
        %v286 = vrot.slane %v285, 4
        %v287 = vmax.f32 %v285, %v286
        %v288 = vrot.slane %v287, 2
        %v289 = vmax.f32 %v287, %v288
        %v290 = vrot.slane %v289, 1
        %v291 = vmax.f32 %v289, %v290
        %v292 = vsub.f32 %v249, %v278
        %v293 = vsub.f32 %v250, %v291
        %v294 = vsub.f32 %v251, %v278
        %v295 = vsub.f32 %v252, %v291
        %v296 = vsub.f32 %v253, %v278
        %v297 = vsub.f32 %v254, %v291
        %v298 = vsub.f32 %v255, %v278
        %v299 = vsub.f32 %v256, %v291
        %v300 = vsub.f32 %v257, %v278
        %v301 = vsub.f32 %v258, %v291
        %v302 = vsub.f32 %v259, %v278
        %v303 = vsub.f32 %v260, %v291
        %v304 = vsub.f32 %v261, %v278
        %v305 = vsub.f32 %v262, %v291
        %v306 = vsub.f32 %v263, %v278
        %v307 = vsub.f32 %v264, %v291
        %v308 = vmul.f32 %v292, 1.442695
        %v309 = vpow.pop %v308
        %v310 = vmul.f32 %v293, 1.442695
        %v311 = vpow.pop %v310
        %v312 = vmul.f32 %v294, 1.442695
        %v313 = vpow.pop %v312
        %v314 = vmul.f32 %v295, 1.442695
        %v315 = vpow.pop %v314
        %v316 = vmul.f32 %v296, 1.442695
        %v317 = vpow.pop %v316
        %v318 = vmul.f32 %v297, 1.442695
        %v319 = vpow.pop %v318
        %v320 = vmul.f32 %v298, 1.442695
        %v321 = vpow.pop %v320
        %v322 = vmul.f32 %v299, 1.442695
        %v323 = vpow.pop %v322
        %v324 = vmul.f32 %v300, 1.442695
        %v325 = vpow.pop %v324
        %v326 = vmul.f32 %v301, 1.442695
        %v327 = vpow.pop %v326
        %v328 = vmul.f32 %v302, 1.442695
        %v329 = vpow.pop %v328
        %v330 = vmul.f32 %v303, 1.442695
        %v331 = vpow.pop %v330
        %v332 = vmul.f32 %v304, 1.442695
        %v333 = vpow.pop %v332
        %v334 = vmul.f32 %v305, 1.442695
        %v335 = vpow.pop %v334
        %v336 = vmul.f32 %v306, 1.442695
        %v337 = vpow.pop %v336
        %v338 = vmul.f32 %v307, 1.442695
        %v339 = vpow.pop %v338
        %v340 = vadd.f32 %v309, %v313
        %v341 = vadd.f32 %v340, %v317
        %v342 = vadd.f32 %v341, %v321
        %v343 = vadd.f32 %v342, %v325
        %v344 = vadd.f32 %v343, %v329
        %v345 = vadd.f32 %v344, %v333
        %v346 = vadd.f32 %v345, %v337
        %v347 = vrot.slane %v346, 4
        %v348 = vadd.f32 %v346, %v347
        %v349 = vrot.slane %v348, 2
        %v350 = vadd.f32 %v348, %v349
        %v351 = vrot.slane %v350, 1
        %v352 = vadd.f32 %v350, %v351
        %v353 = vadd.f32 %v311, %v315
        %v354 = vadd.f32 %v353, %v319
        %v355 = vadd.f32 %v354, %v323
        %v356 = vadd.f32 %v355, %v327
        %v357 = vadd.f32 %v356, %v331
        %v358 = vadd.f32 %v357, %v335
        %v359 = vadd.f32 %v358, %v339
        %v360 = vrot.slane %v359, 4
        %v361 = vadd.f32 %v359, %v360
        %v362 = vrot.slane %v361, 2
        %v363 = vadd.f32 %v361, %v362
        %v364 = vrot.slane %v363, 1
        %v365 = vadd.f32 %v363, %v364
        %v366 = vlog2.pop %v352
        %v367 = vmul.f32 %v366, 0.6931472
        %v368 = vlog2.pop %v365
        %v369 = vmul.f32 %v368, 0.6931472
        %v370 = vlaneseq
        %v371 = vshrl.u32 %v370, 7
        %v372 = vadd.s32 %v371, 8
        %v373 = vadd.s32 %v371, 16
        %v374 = vadd.s32 %v371, 24
        %v375 = vadd.s32 %v371, 32
        %v376 = vadd.s32 %v371, 40
        %v377 = vadd.s32 %v371, 48
        %v378 = vadd.s32 %v371, 56
        %v379 = vcvt.s32.f32 %v371
        %v380 = vcvt.s32.f32 %v372
        %v381 = vcvt.s32.f32 %v373
        %v382 = vcvt.s32.f32 %v374
        %v383 = vcvt.s32.f32 %v375
        %v384 = vcvt.s32.f32 %v376
        %v385 = vcvt.s32.f32 %v377
        %v386 = vcvt.s32.f32 %v378
        %v387 = vmul.f32 %v379, 0.32258064
        %v388 = vmul.f32 %v380, 0.32258064
        %v389 = vmul.f32 %v381, 0.32258064
        %v390 = vmul.f32 %v382, 0.32258064
        %v391 = vmul.f32 %v383, 0.32258064
        %v392 = vmul.f32 %v384, 0.32258064
        %v393 = vmul.f32 %v385, 0.32258064
        %v394 = vmul.f32 %v386, 0.32258064
        %v395 = vadd.f32 %v387, 0.0
        %v396 = vadd.f32 %v388, 0.0
        %v397 = vadd.f32 %v389, 0.0
        %v398 = vadd.f32 %v390, 0.0
        %v399 = vadd.f32 %v391, 0.0
        %v400 = vadd.f32 %v392, 0.0
        %v401 = vadd.f32 %v393, 0.0
        %v402 = vadd.f32 %v394, 0.0
        %v404 = vlaneseq
        %v405 = vshrl.u32 %v404, 7
        %v406 = vsub.s32 0, %v405
        %v407 = vrot.slane %v265, %v406
        %v408 = vlaneseq
        %v409 = vshrl.u32 %v408, 7
        %v410 = vsub.s32 1, %v409
        %v411 = vrot.slane %v265, %v410
        %v414 = vsub.f32 %v407, %v395
        %v415 = vsub.f32 %v411, %v395
        %v416 = vsub.f32 %v407, %v396
        %v417 = vsub.f32 %v411, %v396
        %v418 = vsub.f32 %v407, %v397
        %v419 = vsub.f32 %v411, %v397
        %v420 = vsub.f32 %v407, %v398
        %v421 = vsub.f32 %v411, %v398
        %v422 = vsub.f32 %v407, %v399
        %v423 = vsub.f32 %v411, %v399
        %v424 = vsub.f32 %v407, %v400
        %v425 = vsub.f32 %v411, %v400
        %v426 = vsub.f32 %v407, %v401
        %v427 = vsub.f32 %v411, %v401
        %v428 = vsub.f32 %v407, %v402
        %v429 = vsub.f32 %v411, %v402
        %v430 = vmul.f32 %v414, -120.125
        %v431 = vmul.f32 %v415, -120.125
        %v432 = vmul.f32 %v416, -120.125
        %v433 = vmul.f32 %v417, -120.125
        %v434 = vmul.f32 %v418, -120.125
        %v435 = vmul.f32 %v419, -120.125
        %v436 = vmul.f32 %v420, -120.125
        %v437 = vmul.f32 %v421, -120.125
        %v438 = vmul.f32 %v422, -120.125
        %v439 = vmul.f32 %v423, -120.125
        %v440 = vmul.f32 %v424, -120.125
        %v441 = vmul.f32 %v425, -120.125
        %v442 = vmul.f32 %v426, -120.125
        %v443 = vmul.f32 %v427, -120.125
        %v444 = vmul.f32 %v428, -120.125
        %v445 = vmul.f32 %v429, -120.125
        %v446 = vmul.f32 %v430, %v414
        %v447 = vmul.f32 %v431, %v415
        %v448 = vmul.f32 %v432, %v416
        %v449 = vmul.f32 %v433, %v417
        %v450 = vmul.f32 %v434, %v418
        %v451 = vmul.f32 %v435, %v419
        %v452 = vmul.f32 %v436, %v420
        %v453 = vmul.f32 %v437, %v421
        %v454 = vmul.f32 %v438, %v422
        %v455 = vmul.f32 %v439, %v423
        %v456 = vmul.f32 %v440, %v424
        %v457 = vmul.f32 %v441, %v425
        %v458 = vmul.f32 %v442, %v426
        %v459 = vmul.f32 %v443, %v427
        %v460 = vmul.f32 %v444, %v428
        %v461 = vmul.f32 %v445, %v429
        %v462 = vmul.f32 %v446, 1.442695
        %v463 = vpow.pop %v462
        %v464 = vmul.f32 %v447, 1.442695
        %v465 = vpow.pop %v464
        %v466 = vmul.f32 %v448, 1.442695
        %v467 = vpow.pop %v466
        %v468 = vmul.f32 %v449, 1.442695
        %v469 = vpow.pop %v468
        %v470 = vmul.f32 %v450, 1.442695
        %v471 = vpow.pop %v470
        %v472 = vmul.f32 %v451, 1.442695
        %v473 = vpow.pop %v472
        %v474 = vmul.f32 %v452, 1.442695
        %v475 = vpow.pop %v474
        %v476 = vmul.f32 %v453, 1.442695
        %v477 = vpow.pop %v476
        %v478 = vmul.f32 %v454, 1.442695
        %v479 = vpow.pop %v478
        %v480 = vmul.f32 %v455, 1.442695
        %v481 = vpow.pop %v480
        %v482 = vmul.f32 %v456, 1.442695
        %v483 = vpow.pop %v482
        %v484 = vmul.f32 %v457, 1.442695
        %v485 = vpow.pop %v484
        %v486 = vmul.f32 %v458, 1.442695
        %v487 = vpow.pop %v486
        %v488 = vmul.f32 %v459, 1.442695
        %v489 = vpow.pop %v488
        %v490 = vmul.f32 %v460, 1.442695
        %v491 = vpow.pop %v490
        %v492 = vmul.f32 %v461, 1.442695
        %v493 = vpow.pop %v492
        %v494 = vadd.f32 %v463, %v467
        %v495 = vadd.f32 %v494, %v471
        %v496 = vadd.f32 %v495, %v475
        %v497 = vadd.f32 %v496, %v479
        %v498 = vadd.f32 %v497, %v483
        %v499 = vadd.f32 %v498, %v487
        %v500 = vadd.f32 %v499, %v491
        %v501 = vrot.slane %v500, 4
        %v502 = vadd.f32 %v500, %v501
        %v503 = vrot.slane %v502, 2
        %v504 = vadd.f32 %v502, %v503
        %v505 = vrot.slane %v504, 1
        %v506 = vadd.f32 %v504, %v505
        %v507 = vadd.f32 %v465, %v469
        %v508 = vadd.f32 %v507, %v473
        %v509 = vadd.f32 %v508, %v477
        %v510 = vadd.f32 %v509, %v481
        %v511 = vadd.f32 %v510, %v485
        %v512 = vadd.f32 %v511, %v489
        %v513 = vadd.f32 %v512, %v493
        %v514 = vrot.slane %v513, 4
        %v515 = vadd.f32 %v513, %v514
        %v516 = vrot.slane %v515, 2
        %v517 = vadd.f32 %v515, %v516
        %v518 = vrot.slane %v517, 1
        %v519 = vadd.f32 %v517, %v518
        %v520 = vmul.f32 %v463, %v446
        %v521 = vmul.f32 %v465, %v447
        %v522 = vmul.f32 %v467, %v448
        %v523 = vmul.f32 %v469, %v449
        %v524 = vmul.f32 %v471, %v450
        %v525 = vmul.f32 %v473, %v451
        %v526 = vmul.f32 %v475, %v452
        %v527 = vmul.f32 %v477, %v453
        %v528 = vmul.f32 %v479, %v454
        %v529 = vmul.f32 %v481, %v455
        %v530 = vmul.f32 %v483, %v456
        %v531 = vmul.f32 %v485, %v457
        %v532 = vmul.f32 %v487, %v458
        %v533 = vmul.f32 %v489, %v459
        %v534 = vmul.f32 %v491, %v460
        %v535 = vmul.f32 %v493, %v461
        %v536 = vadd.f32 %v520, %v522
        %v537 = vadd.f32 %v536, %v524
        %v538 = vadd.f32 %v537, %v526
        %v539 = vadd.f32 %v538, %v528
        %v540 = vadd.f32 %v539, %v530
        %v541 = vadd.f32 %v540, %v532
        %v542 = vadd.f32 %v541, %v534
        %v543 = vrot.slane %v542, 4
        %v544 = vadd.f32 %v542, %v543
        %v545 = vrot.slane %v544, 2
        %v546 = vadd.f32 %v544, %v545
        %v547 = vrot.slane %v546, 1
        %v548 = vadd.f32 %v546, %v547
        %v549 = vadd.f32 %v521, %v523
        %v550 = vadd.f32 %v549, %v525
        %v551 = vadd.f32 %v550, %v527
        %v552 = vadd.f32 %v551, %v529
        %v553 = vadd.f32 %v552, %v531
        %v554 = vadd.f32 %v553, %v533
        %v555 = vadd.f32 %v554, %v535
        %v556 = vrot.slane %v555, 4
        %v557 = vadd.f32 %v555, %v556
        %v558 = vrot.slane %v557, 2
        %v559 = vadd.f32 %v557, %v558
        %v560 = vrot.slane %v559, 1
        %v561 = vadd.f32 %v559, %v560
        %v562 = vmul.f32 %v463, %v292
        %v563 = vmul.f32 %v465, %v293
        %v564 = vmul.f32 %v467, %v294
        %v565 = vmul.f32 %v469, %v295
        %v566 = vmul.f32 %v471, %v296
        %v567 = vmul.f32 %v473, %v297
        %v568 = vmul.f32 %v475, %v298
        %v569 = vmul.f32 %v477, %v299
        %v570 = vmul.f32 %v479, %v300
        %v571 = vmul.f32 %v481, %v301
        %v572 = vmul.f32 %v483, %v302
        %v573 = vmul.f32 %v485, %v303
        %v574 = vmul.f32 %v487, %v304
        %v575 = vmul.f32 %v489, %v305
        %v576 = vmul.f32 %v491, %v306
        %v577 = vmul.f32 %v493, %v307
        %v578 = vadd.f32 %v562, %v564
        %v579 = vadd.f32 %v578, %v566
        %v580 = vadd.f32 %v579, %v568
        %v581 = vadd.f32 %v580, %v570
        %v582 = vadd.f32 %v581, %v572
        %v583 = vadd.f32 %v582, %v574
        %v584 = vadd.f32 %v583, %v576
        %v585 = vrot.slane %v584, 4
        %v586 = vadd.f32 %v584, %v585
        %v587 = vrot.slane %v586, 2
        %v588 = vadd.f32 %v586, %v587
        %v589 = vrot.slane %v588, 1
        %v590 = vadd.f32 %v588, %v589
        %v591 = vadd.f32 %v563, %v565
        %v592 = vadd.f32 %v591, %v567
        %v593 = vadd.f32 %v592, %v569
        %v594 = vadd.f32 %v593, %v571
        %v595 = vadd.f32 %v594, %v573
        %v596 = vadd.f32 %v595, %v575
        %v597 = vadd.f32 %v596, %v577
        %v598 = vrot.slane %v597, 4
        %v599 = vadd.f32 %v597, %v598
        %v600 = vrot.slane %v599, 2
        %v601 = vadd.f32 %v599, %v600
        %v602 = vrot.slane %v601, 1
        %v603 = vadd.f32 %v601, %v602
        %v604 = vmul.f32 %v463, %v463
        %v605 = vmul.f32 %v465, %v465
        %v606 = vmul.f32 %v467, %v467
        %v607 = vmul.f32 %v469, %v469
        %v608 = vmul.f32 %v471, %v471
        %v609 = vmul.f32 %v473, %v473
        %v610 = vmul.f32 %v475, %v475
        %v611 = vmul.f32 %v477, %v477
        %v612 = vmul.f32 %v479, %v479
        %v613 = vmul.f32 %v481, %v481
        %v614 = vmul.f32 %v483, %v483
        %v615 = vmul.f32 %v485, %v485
        %v616 = vmul.f32 %v487, %v487
        %v617 = vmul.f32 %v489, %v489
        %v618 = vmul.f32 %v491, %v491
        %v619 = vmul.f32 %v493, %v493
        %v620 = vadd.f32 %v604, %v606
        %v621 = vadd.f32 %v620, %v608
        %v622 = vadd.f32 %v621, %v610
        %v623 = vadd.f32 %v622, %v612
        %v624 = vadd.f32 %v623, %v614
        %v625 = vadd.f32 %v624, %v616
        %v626 = vadd.f32 %v625, %v618
        %v627 = vrot.slane %v626, 4
        %v628 = vadd.f32 %v626, %v627
        %v629 = vrot.slane %v628, 2
        %v630 = vadd.f32 %v628, %v629
        %v631 = vrot.slane %v630, 1
        %v632 = vadd.f32 %v630, %v631
        %v633 = vadd.f32 %v605, %v607
        %v634 = vadd.f32 %v633, %v609
        %v635 = vadd.f32 %v634, %v611
        %v636 = vadd.f32 %v635, %v613
        %v637 = vadd.f32 %v636, %v615
        %v638 = vadd.f32 %v637, %v617
        %v639 = vadd.f32 %v638, %v619
        %v640 = vrot.slane %v639, 4
        %v641 = vadd.f32 %v639, %v640
        %v642 = vrot.slane %v641, 2
        %v643 = vadd.f32 %v641, %v642
        %v644 = vrot.slane %v643, 1
        %v645 = vadd.f32 %v643, %v644
        %vm646 = vcmp.ge.f32.partialorder %v265, 20.0
        %v647 = vsel %vm646, 1, 0
        %v648 = vcvt.s32.f32 %v647
        %v649 = vsub.f32 %v506, %v491
        %v650 = vsub.f32 %v519, %v493
        %v652 = vlaneseq
        %v653 = vshrl.u32 %v652, 7
        %v654 = vsub.s32 0, %v653
        %v655 = vrot.slane %v648, %v654
        %v656 = vlaneseq
        %v657 = vshrl.u32 %v656, 7
        %v658 = vsub.s32 1, %v657
        %v659 = vrot.slane %v648, %v658
        %v662 = vadd.f32 %v649, %v655
        %v663 = vadd.f32 %v650, %v659
        %v664 = vsub.f32 %v548, %v534
        %v665 = vsub.f32 %v561, %v535
        %v666 = vsub.f32 %v590, %v576
        %v667 = vsub.f32 %v603, %v577
        %v670 = vcombine.high %v306, %v307
        %v672 = vunpack.c.l.s4 1966171168
        %v673 = vunpack.c.0.s8 %v672
        %v674 = vlaneseq
        %v675 = vshrl.u32 %v674, 7
        %v676 = vsub.s32 %v673, %v675
        %v677 = vrot.slane %v670, %v676
        %v678 = vcombine.high %v677, %v677
        %v680 = vunpack.c.l.s4 1966171168
        %v681 = vunpack.c.0.s8 %v680
        %v682 = vlaneseq
        %v683 = vshrl.u32 %v682, 7
        %v684 = vsub.s32 %v681, %v683
        %v685 = vrot.slane %v678, %v684
        %v686 = vcombine.high %v685, %v685
        %v688 = vmul.f32 %v648, %v686
        %v690 = vlaneseq
        %v691 = vshrl.u32 %v690, 7
        %v692 = vsub.s32 0, %v691
        %v693 = vrot.slane %v688, %v692
        %v694 = vlaneseq
        %v695 = vshrl.u32 %v694, 7
        %v696 = vsub.s32 1, %v695
        %v697 = vrot.slane %v688, %v696
        %v700 = vadd.f32 %v666, %v693
        %v701 = vadd.f32 %v667, %v697
        %v702 = vsub.f32 %v632, %v618
        %v703 = vsub.f32 %v645, %v619
        %v704 = vadd.f32 %v702, %v655
        %v705 = vadd.f32 %v703, %v659
        %v706 = vrsqrt.pop %v704
        %v707 = vmul.f32 %v704, %v706
        %vm708 = vcmp.eq.f32.partialorder %v704, inf
        %v709 = vsel %vm708, %v704, %v707
        %vm710 = vcmp.eq.f32.partialorder %v704, 0.0
        %v711 = vand.u32 %v704, 2147483648
        %v712 = vsel %vm710, %v711, %v709
        %v713 = vrsqrt.pop %v705
        %v714 = vmul.f32 %v705, %v713
        %vm715 = vcmp.eq.f32.partialorder %v705, inf
        %v716 = vsel %vm715, %v705, %v714
        %vm717 = vcmp.eq.f32.partialorder %v705, 0.0
        %v718 = vand.u32 %v705, 2147483648
        %v719 = vsel %vm717, %v718, %v716
        %v720 = vadd.f32 %v712, 1e-06
        %v721 = vadd.f32 %v719, 1e-06
        %v722 = vrcp.pop %v720
        %v723 = vrcp.pop %v721
        %v724 = vlog2.pop %v720
        %v725 = vmul.f32 %v724, 0.6931472
        %v726 = vlog2.pop %v721
        %v727 = vmul.f32 %v726, 0.6931472
        %v728 = vsub.f32 %v664, %v700
        %v729 = vsub.f32 %v665, %v701
        %v730 = vsub.f32 %v367, %v725
        %v731 = vsub.f32 %v369, %v727
        %v732 = vmul.f32 %v730, %v662
        %v733 = vmul.f32 %v731, %v663
        %v734 = vadd.f32 %v728, %v732
        %v735 = vadd.f32 %v729, %v733
        %v736 = vmul.f32 %v722, %v734
        %v737 = vmul.f32 %v723, %v735
        %v738 = vld [vmem:[%s234] sm:$0x3]
        %v741 = vcombine.high %v736, %v737
        %v743 = vunpack.c.l.s4 1966171168
        %v744 = vunpack.c.0.s8 %v743
        %v745 = vlaneseq
        %v746 = vshrl.u32 %v745, 7
        %v747 = vsub.s32 %v744, %v746
        %v748 = vrot.slane %v741, %v747
        %v749 = vcombine.high %v748, %v748
        %v751 = vunpack.c.l.s4 1966171168
        %v752 = vunpack.c.0.s8 %v751
        %v753 = vlaneseq
        %v754 = vshrl.u32 %v753, 7
        %v755 = vsub.s32 %v752, %v754
        %v756 = vrot.slane %v749, %v755
        %v757 = vcombine.high %v756, %v756
        %v759 = vadd.f32 %v738, %v757
        %v760 = vlaneseq
        %vm761 = vcmp.ge.s32.totalorder %v760, 0
        %vm762 = vcmp.lt.s32.totalorder %v760, 256
        %vm763 = vmand %vm761, %vm762
        %764 = vst.msk [vmem:[%s234] sm:$0x3] %vm763, %v759
        %s765 = sand.u32 %s111, 1
        %s766 = scalar_lea.sflag [#allocation4], %s765
        %s767 = sand.u32 %s111, 1
        %s768 = smul.addr %s767, 2
        %s769 = scalar_lea.vmem [#allocation7], %s768
        // Predicated region
        $region41: #{tpu_custom_call.1} parent=27 // pred_check
          %p770 = pneg %p121
        $region42: #{tpu_custom_call.1} parent=27 // pred_check_branch
          %772 = sbr.rel (%p770) target = $region44
        $region43: #{tpu_custom_call.1} parent=27 // pred_region
          %s773 = sadd.s32 %s27, %s28
          %s775 = ssub.s32 32, 32
          %776 = vsyncadd %s766, %s775
          %s777 = smul.addr %s773, 2
          %s778 = smul.addr %s777, 16
          %s779 = scalar_lea.hbm %s2, %s778
          %s781 = sshll.u32 %s769, 4
          %s782 = int_to_ptr.vmem [resolvable:$true] %s781
          %784 = dma.vmem_to_hbm [thread:$0]  %s782, 32, %s779, %s766
        $region44: #{tpu_custom_call.1} parent=27 // pred_fallthru
          _
      $region28: #{tpu_custom_call.1} parent=5 // pred_fallthru
        _
      %p785 = scmp.le.s32.totalorder 2, %s17
      // Predicated region
      $region45: #{tpu_custom_call.1} parent=5 // pred_check
        %p786 = pneg %p785
      $region46: #{tpu_custom_call.1} parent=5 // pred_check_branch
        %788 = sbr.rel (%p786) target = $region48
      $region47: #{tpu_custom_call.1} parent=5 // pred_region
        %s789 = ssub.s32 %s17, 2
        // Predicated region
        $region49: #{tpu_custom_call.1} parent=47 // pred_check
          %p790 = pneg %p127
        $region50: #{tpu_custom_call.1} parent=47 // pred_check_branch
          %792 = sbr.rel (%p790) target = $region52
        $region51: #{tpu_custom_call.1} parent=47 // pred_region
          %s793 = sand.u32 %s112, 1
          %s794 = scalar_lea.sflag [#allocation4], %s793
          %s795 = sand.u32 %s112, 1
          %s796 = smul.addr %s795, 2
          %s797 = scalar_lea.vmem [#allocation7], %s796
          %798 = dma.done %s794, 32
        $region52: #{tpu_custom_call.1} parent=47 // pred_fallthru
          _
      $region48: #{tpu_custom_call.1} parent=5 // pred_fallthru
        _
    $region6: #{tpu_custom_call.1} parent=1 // loop_footer
      %s21 = sadd.s32 1, %s17
    $region7: #{tpu_custom_call.1} parent=1 // loop_footer_branch
      %16 = sbr.rel target = $region3
    $region8: #{tpu_custom_call.1} parent=1 // loop_exit
      _
    %799 = vsyncpa [#allocation3], 1
    %s800 = scalar_lea.sflag [#allocation3], 1
    %801 = vsyncpa %s800, 1
    %802 = vsyncpa [#allocation6], 1
    %s803 = scalar_lea.sflag [#allocation6], 1
    %804 = vsyncpa %s803, 1
    %805 = vsyncpa [#allocation4], 1
    %s806 = scalar_lea.sflag [#allocation4], 1
    %807 = vsyncpa %s806, 1

</llo_original>
